<compile_context>
chip_gen: v6e
topology: v6e:2x2x1
jax: 0.10.0
libtpu: 0.0.40
codegen_flags: <defaults>
</compile_context>

<pallas_src>
import jax
import jax.numpy as jnp
from jax import lax
from jax.experimental import pallas as pl
from jax.experimental.pallas import tpu as pltpu


def _shift_edge_replicate(x, axis, direction):
    """Shift x by one along `axis`, filling the vacated edge with the edge value.

    direction=+1: result[i] = x[i-1]  (result[0]   = x[0])
    direction=-1: result[i] = x[i+1]  (result[n-1] = x[n-1])
    """
    n = x.shape[axis]
    if n == 1:
        return x

    def sl(lo, hi):
        idx = [slice(None)] * x.ndim
        idx[axis] = slice(lo, hi)
        return x[tuple(idx)]

    if direction > 0:
        return jnp.concatenate([sl(0, 1), sl(0, n - 1)], axis=axis)
    return jnp.concatenate([sl(1, n), sl(n - 1, n)], axis=axis)


def _nms_subtract(x, w_axis, h_axis):
    """x - 1 where x is not the (tie-inclusive) max of its 3x3 (H, W) neighborhood."""
    # Separable 3x3 max with edge replication (equivalent to -inf padding since the
    # center tap is always part of the running max).
    m = jnp.maximum(jnp.maximum(_shift_edge_replicate(x, w_axis, +1), x),
                    _shift_edge_replicate(x, w_axis, -1))
    y = jnp.maximum(jnp.maximum(_shift_edge_replicate(m, h_axis, +1), m),
                    _shift_edge_replicate(m, h_axis, -1))
    return jnp.where(x < y, x - 1.0, x)


def keypoint_plane_kernel(x_ref, o_ref):
    # Block: (B, H, W).  W -> lanes, H -> sublanes.  Stencil never crosses planes.
    x = x_ref[...]
    o_ref[...] = _nms_subtract(x, w_axis=2, h_axis=1)


def keypoint_cl_kernel(x_ref, o_ref):
    # Block: (H, W, CB), channels-last.  Channels -> lanes (dense), W -> sublanes.
    x = x_ref[...]
    o_ref[...] = _nms_subtract(x, w_axis=1, h_axis=0)


def _pick_block(total, unit_bytes, target_bytes, multiple_of=1):
    """Largest divisor of `total` (a multiple of `multiple_of`) whose block fits the
    byte budget; prefers >= 2 grid steps (v7x megacore balance) if that does not cost
    more than 4x in block size."""
    cands = [d for d in range(multiple_of, total + 1, multiple_of) if total % d == 0]
    if not cands:
        cands = [total]
    fits = [d for d in cands if d * unit_bytes <= target_bytes]
    if not fits:
        return min(cands)
    best = max(fits)
    two = [d for d in fits if total // d >= 2]
    if two and max(two) * 4 >= best:
        best = max(two)
    return best


def keypoint_extract(x, *, target_block_bytes=1 << 20):
    """x: (N, C, H, W) float32 -> (N, C, H, W) float32 (MaxPool3x3-based NMS)."""
    N, C, H, W = x.shape
    NC = N * C
    itemsize = jnp.dtype(x.dtype).itemsize
    xr = x.reshape(NC, H, W)
    params = pltpu.CompilerParams(dimension_semantics=("parallel",))

    if W < 128 and NC % 128 == 0:
        # Lane-dense channels-last path: lanes carry N*C (multiple of 128), so every
        # load/store is a full-width unmasked vst/vld.  Transpose is wrapper-side
        # layout plumbing.
        xt = jnp.transpose(xr, (1, 2, 0))                      # (H, W, NC)
        cb = _pick_block(NC, H * W * itemsize, target_block_bytes, multiple_of=128)
        out_t = pl.pallas_call(
            keypoint_cl_kernel,
            out_shape=jax.ShapeDtypeStruct((H, W, NC), x.dtype),
            grid=(NC // cb,),
            in_specs=[pl.BlockSpec((H, W, cb), lambda i: (0, 0, i))],
            out_specs=pl.BlockSpec((H, W, cb), lambda i: (0, 0, i)),
            compiler_params=params,
        )(xt)
        return jnp.transpose(out_t, (2, 0, 1)).reshape(N, C, H, W)

    # Plane-blocked path: many whole (H, W) planes per grid step.
    b = _pick_block(NC, H * W * itemsize, target_block_bytes, multiple_of=1)
    out = pl.pallas_call(
        keypoint_plane_kernel,
        out_shape=jax.ShapeDtypeStruct((NC, H, W), x.dtype),
        grid=(NC // b,),
        in_specs=[pl.BlockSpec((b, H, W), lambda i: (i, 0, 0))],
        out_specs=pl.BlockSpec((b, H, W), lambda i: (i, 0, 0)),
        compiler_params=params,
    )(xr)
    return out.reshape(N, C, H, W)


def keypoint_extract_ref(x):
    # Pure-JAX reference: reduce_window max with SAME padding (init = -inf).
    y = lax.reduce_window(x, -jnp.inf, lax.max,
                          window_dimensions=(1, 1, 3, 3),
                          window_strides=(1, 1, 1, 1),
                          padding="SAME")
    return x - (x < y).astype(x.dtype)


if __name__ == "__main__":
    key = jax.random.PRNGKey(0)
    k0, k1 = jax.random.split(key)

    # Primary test (plane-blocked path: N*C = 8, B = 4, grid = 2).
    x = jax.random.normal(k0, (2, 4, 16, 16), dtype=jnp.float32)
    out = jax.block_until_ready(keypoint_extract(x))
    ref = keypoint_extract_ref(x)
    assert out.shape == ref.shape and out.dtype == ref.dtype
    assert jnp.allclose(out, ref, atol=1e-6, rtol=0), "mismatch (plane path)"

    # Also exercise the lane-dense channels-last path (W < 128, N*C multiple of 128).
    x2 = jax.random.normal(k1, (8, 32, 16, 16), dtype=jnp.float32)
    out2 = jax.block_until_ready(keypoint_extract(x2))
    ref2 = keypoint_extract_ref(x2)
    assert jnp.allclose(out2, ref2, atol=1e-6, rtol=0), "mismatch (channels-last path)"

    print("KERNEL_OK")
</pallas_src>

<mosaic_0001>
module attributes {stable_mosaic.version = 11 : i64} {
  func.func @keypoint_plane_kernel(%arg0: i32, %arg1: memref<4x16x16xf32, #tpu.memory_space<vmem>>, %arg2: memref<4x16x16xf32, #tpu.memory_space<vmem>>) attributes {dimension_semantics = [#tpu.dimension_semantics<parallel>], iteration_bounds = array<i64: 2>, scalar_prefetch = 0 : i64, scratch_operands = 0 : i64, tpu.core_type = #tpu.core_type<tc>, window_params = [{transform_indices = @transform_0, window_bounds = array<i64: 4, 16, 16>}, {transform_indices = @transform_1, window_bounds = array<i64: 4, 16, 16>}]} {
    %c0 = arith.constant 0 : index
    %c0_0 = arith.constant 0 : index
    %c0_1 = arith.constant 0 : index
    %0 = vector.load %arg1[%c0, %c0_0, %c0_1] : memref<4x16x16xf32, #tpu.memory_space<vmem>>, vector<4x16x16xf32>
    %1 = vector.extract_strided_slice %0 {offsets = [0, 0, 0], sizes = [4, 16, 1], strides = [1, 1, 1]} : vector<4x16x16xf32> to vector<4x16x1xf32>
    %2 = vector.extract_strided_slice %0 {offsets = [0, 0, 0], sizes = [4, 16, 15], strides = [1, 1, 1]} : vector<4x16x16xf32> to vector<4x16x15xf32>
    %3 = tpu.concatenate %1, %2 in 2 : vector<4x16x1xf32>, vector<4x16x15xf32> -> vector<4x16x16xf32>
    %4 = arith.maximumf %3, %0 : vector<4x16x16xf32>
    %5 = vector.extract_strided_slice %0 {offsets = [0, 0, 1], sizes = [4, 16, 15], strides = [1, 1, 1]} : vector<4x16x16xf32> to vector<4x16x15xf32>
    %6 = vector.extract_strided_slice %0 {offsets = [0, 0, 15], sizes = [4, 16, 1], strides = [1, 1, 1]} : vector<4x16x16xf32> to vector<4x16x1xf32>
    %7 = tpu.concatenate %5, %6 in 2 : vector<4x16x15xf32>, vector<4x16x1xf32> -> vector<4x16x16xf32>
    %8 = arith.maximumf %4, %7 : vector<4x16x16xf32>
    %9 = vector.extract_strided_slice %8 {offsets = [0, 0, 0], sizes = [4, 1, 16], strides = [1, 1, 1]} : vector<4x16x16xf32> to vector<4x1x16xf32>
    %10 = vector.extract_strided_slice %8 {offsets = [0, 0, 0], sizes = [4, 15, 16], strides = [1, 1, 1]} : vector<4x16x16xf32> to vector<4x15x16xf32>
    %11 = tpu.concatenate %9, %10 in 1 : vector<4x1x16xf32>, vector<4x15x16xf32> -> vector<4x16x16xf32>
    %12 = arith.maximumf %11, %8 : vector<4x16x16xf32>
    %13 = vector.extract_strided_slice %8 {offsets = [0, 1, 0], sizes = [4, 15, 16], strides = [1, 1, 1]} : vector<4x16x16xf32> to vector<4x15x16xf32>
    %14 = vector.extract_strided_slice %8 {offsets = [0, 15, 0], sizes = [4, 1, 16], strides = [1, 1, 1]} : vector<4x16x16xf32> to vector<4x1x16xf32>
    %15 = tpu.concatenate %13, %14 in 1 : vector<4x15x16xf32>, vector<4x1x16xf32> -> vector<4x16x16xf32>
    %16 = arith.maximumf %12, %15 : vector<4x16x16xf32>
    %17 = arith.cmpf olt, %0, %16 : vector<4x16x16xf32>
    %cst = arith.constant 1.000000e+00 : f32
    %18 = vector.broadcast %cst : f32 to vector<4x16x16xf32>
    %19 = arith.subf %0, %18 : vector<4x16x16xf32>
    %20 = arith.select %17, %19, %0 : vector<4x16x16xi1>, vector<4x16x16xf32>
    %c0_2 = arith.constant 0 : index
    %c0_3 = arith.constant 0 : index
    %c0_4 = arith.constant 0 : index
    %21 = vector.load %arg2[%c0_2, %c0_3, %c0_4] : memref<4x16x16xf32, #tpu.memory_space<vmem>>, vector<4x16x16xf32>
    tpu.vector_store %arg2[%c0_2, %c0_3, %c0_4], %20 {strides = array<i32>} : memref<4x16x16xf32, #tpu.memory_space<vmem>>, vector<4x16x16xf32>,
    return
  }
  func.func @transform_0(%arg0: i32) -> (i32, i32, i32) {
    %c0_i32 = arith.constant 0 : i32
    %c0_i32_0 = arith.constant 0 : i32
    %c0_i32_1 = arith.constant 0 : i32
    return %arg0, %c0_i32, %c0_i32_0 : i32, i32, i32
  }
  func.func @transform_1(%arg0: i32) -> (i32, i32, i32) {
    %c0_i32 = arith.constant 0 : i32
    %c0_i32_0 = arith.constant 0 : i32
    %c0_i32_1 = arith.constant 0 : i32
    return %arg0, %c0_i32, %c0_i32_0 : i32, i32, i32
  }
}

</mosaic_0001>

<llo_original>
// kernel: tpu_custom_call.1
$region0: #{tpu_custom_call.1}
  #allocation0 [shape = 'u32[]', space=smem, size = 0x4, offset = 0x4, fixed_abs, tag = 'smem constant byte address 0x4 - core index']
  #allocation1 [shape = 'u32[144,128]{1,0:T(1,128)}', space=vmem, size = 0x12000, scoped, tag = 'internal scratch']
  %s0 = inlined_call_operand.hbm [shape: f32[8,16,16], index: 0, kind: input, shape index: {}]
  %s1 = inlined_call_operand.hbm [shape: f32[8,16,16], index: 1, kind: output, shape index: {}]
  %s2 = sld [smem:[#allocation0]]
  $region41: #{tpu_custom_call.1} parent=0
    _
  %s4 = ssub.s32 1, %s2
  %s5 = scalar_select 0, %s4, %s2
  $region1: #{tpu_custom_call.1} parent=0
    #allocation2 [shape = 'u8[65536]{0}', space=vmem, size = 0x10000, scoped, tag = 'input window, operand 0']
    #allocation3 [shape = 's32[2]{0}', space=sflag, size = 0x8, scoped, tag = 'scoped memory for tpu_custom_call.1']
    #allocation4 [shape = 's32[2]{0}', space=sflag, size = 0x8, scoped, tag = 'scoped memory for tpu_custom_call.1']
    #allocation5 [shape = 'u8[65536]{0}', space=vmem, size = 0x10000, scoped, tag = 'output window, operand 0']
    %6 = vsyncpa [#allocation3], 0
    %s7 = scalar_lea.sflag [#allocation3], 1
    %8 = vsyncpa %s7, 0
    %9 = vsyncpa [#allocation4], 0
    %s10 = scalar_lea.sflag [#allocation4], 1
    %11 = vsyncpa %s10, 0
    loop: start=0, step=1, limit=4
    $region2: #{tpu_custom_call.1} parent=1 // loop_pre_header
      _
    $region3: #{tpu_custom_call.1} parent=1 // loop_header
      %s13 = sphi 0, %s17
      %p14 = scmp.ge.s32.totalorder %s13, 4
      %s23 = sphi 0, %s25
      %s26 = sphi 0, %s23
      %s27 = sphi 0, %s26
      %s43 = sphi 0, %s27
      %s49 = sphi 0, %s51
      %s52 = sphi 0, %s49
      %s53 = sphi 0, %s52
      %s69 = sphi 0, %s53
    $region4: #{tpu_custom_call.1} parent=1 // loop_header_branch
      %16 = sbr.rel (%p14) target = $region8
    $region5: #{tpu_custom_call.1} parent=1 // loop_body
      %s18 = ssub.s32 %s13, 1
      %s19 = ssub.s32 %s13, 2
      %s20 = sadd.s32 %s13, 1
      %s21 = ssub.s32 %s13, %s20
      %p22 = scmp.eq.s32.totalorder %s21, 0
      %s24 = sadd.s32 %s23, 1
      %s25 = scalar_select %p22, %s23, %s24
      %p28 = pneg %p22
      %p29 = scmp.eq.s32.totalorder %s13, 1
      %p30 = por %p28, %p29
      %p31 = scmp.ne.s32.totalorder %s23, %s26
      %p32 = scmp.eq.s32.totalorder %s13, 0
      %p33 = por %p31, %p32
      %p34 = scmp.ne.s32.totalorder %s23, %s26
      %p35 = scmp.eq.s32.totalorder %s18, 1
      %p36 = por %p34, %p35
      %p37 = scmp.ne.s32.totalorder %s26, %s27
      %p38 = scmp.eq.s32.totalorder %s18, 0
      %p39 = por %p37, %p38
      %p40 = scmp.ne.s32.totalorder %s26, %s27
      %p41 = scmp.eq.s32.totalorder %s19, 1
      %p42 = por %p40, %p41
      %p44 = scmp.ne.s32.totalorder %s27, %s43
      %p45 = scmp.eq.s32.totalorder %s19, 0
      %p46 = por %p44, %p45
      %s47 = ssub.s32 %s13, %s20
      %p48 = scmp.eq.s32.totalorder %s47, 0
      %s50 = sadd.s32 %s49, 1
      %s51 = scalar_select %p48, %s49, %s50
      %p54 = pneg %p48
      %p55 = scmp.eq.s32.totalorder %s13, 1
      %p56 = por %p54, %p55
      %p57 = scmp.ne.s32.totalorder %s49, %s52
      %p58 = scmp.eq.s32.totalorder %s13, 0
      %p59 = por %p57, %p58
      %p60 = scmp.ne.s32.totalorder %s49, %s52
      %p61 = scmp.eq.s32.totalorder %s18, 1
      %p62 = por %p60, %p61
      %p63 = scmp.ne.s32.totalorder %s52, %s53
      %p64 = scmp.eq.s32.totalorder %s18, 0
      %p65 = por %p63, %p64
      %p66 = scmp.ne.s32.totalorder %s52, %s53
      %p67 = scmp.eq.s32.totalorder %s19, 1
      %p68 = por %p66, %p67
      %p70 = scmp.ne.s32.totalorder %s53, %s69
      %p71 = scmp.eq.s32.totalorder %s19, 0
      %p72 = por %p70, %p71
      %p73 = scmp.le.s32.totalorder 1, %s13
      %p74 = scmp.lt.s32.totalorder %s13, 3
      %p75 = pnand %p73, %p74
      %p76 = pneg %p75
      // Predicated region
      $region9: #{tpu_custom_call.1} parent=5 // pred_check
        _
      $region10: #{tpu_custom_call.1} parent=5 // pred_check_branch
        %78 = sbr.rel (%p75) target = $region12
      $region11: #{tpu_custom_call.1} parent=5 // pred_region
        %s79 = ssub.s32 %s13, 1
      $region12: #{tpu_custom_call.1} parent=5 // pred_fallthru
        _
      %p80 = scmp.lt.s32.totalorder %s13, 2
      // Predicated region
      $region13: #{tpu_custom_call.1} parent=5 // pred_check
        %p81 = pneg %p80
      $region14: #{tpu_custom_call.1} parent=5 // pred_check_branch
        %83 = sbr.rel (%p81) target = $region16
      $region15: #{tpu_custom_call.1} parent=5 // pred_region
        // Predicated region
        $region17: #{tpu_custom_call.1} parent=15 // pred_check
          %p84 = pneg %p33
        $region18: #{tpu_custom_call.1} parent=15 // pred_check_branch
          %86 = sbr.rel (%p84) target = $region20
        $region19: #{tpu_custom_call.1} parent=15 // pred_region
          %s87 = sand.u32 %s23, 1
          %s88 = scalar_lea.sflag [#allocation3], %s87
          %s89 = sand.u32 %s23, 1
          %s90 = smul.addr %s89, 64
          %s91 = scalar_lea.vmem [#allocation2], %s90
          %s92 = smul.u32 4, %s13
          %s94 = ssub.s32 1024, 1024
          %95 = vsyncadd %s88, %s94
          %s96 = smul.addr %s92, 2
          %s97 = smul.addr %s96, 128
          %s98 = scalar_lea.hbm %s0, %s97
          %s99 = sshll.u32 %s91, 4
          %s100 = int_to_ptr.vmem [resolvable:$true] %s99
          %105 = dma.hbm_to_vmem [thread:$0]  %s98, 1024, %s100, %s88, 128, 128, 8
        $region20: #{tpu_custom_call.1} parent=15 // pred_fallthru
          _
      $region16: #{tpu_custom_call.1} parent=5 // pred_fallthru
        _
      %p106 = scmp.le.s32.totalorder 1, %s13
      %p107 = scmp.lt.s32.totalorder %s13, 3
      %p108 = pnand %p106, %p107
      %p109 = pneg %p108
      // Predicated region
      $region21: #{tpu_custom_call.1} parent=5 // pred_check
        _
      $region22: #{tpu_custom_call.1} parent=5 // pred_check_branch
        %111 = sbr.rel (%p108) target = $region24
      $region23: #{tpu_custom_call.1} parent=5 // pred_region
        %s112 = ssub.s32 %s13, 1
        %s113 = sand.u32 %s26, 1
        %s114 = scalar_lea.sflag [#allocation3], %s113
        %s115 = sand.u32 %s26, 1
        %s116 = smul.addr %s115, 64
        %s117 = scalar_lea.vmem [#allocation2], %s116
        // Predicated region
        $region25: #{tpu_custom_call.1} parent=23 // pred_check
          %p118 = pneg %p39
        $region26: #{tpu_custom_call.1} parent=23 // pred_check_branch
          %120 = sbr.rel (%p118) target = $region28
        $region27: #{tpu_custom_call.1} parent=23 // pred_region
          %121 = dma.done %s114, 1024
        $region28: #{tpu_custom_call.1} parent=23 // pred_fallthru
          _
        %s122 = sand.u32 %s26, 1
        %s123 = scalar_lea.sflag [#allocation3], %s122
        %s124 = sand.u32 %s26, 1
        %s125 = smul.addr %s124, 64
        %s126 = scalar_lea.vmem [#allocation2], %s125
        %p127 = pneg %p39
        %p128 = pneg %p36
        %p129 = pneg %p65
        %p130 = pneg %p62
        %s131 = sand.u32 %s52, 1
        %s132 = scalar_lea.sflag [#allocation4], %s131
        %s133 = sand.u32 %s52, 1
        %s134 = smul.addr %s133, 64
        %s135 = scalar_lea.vmem [#allocation5], %s134
        %s136 = smul.u32 4, %s18
        %s137 = smul.u32 4, %s18
        %v138 = vld [vmem:[%s117] sm:$0xff]
        %v139 = vld [vmem:[%s117 + $0x8] sm:$0xff]
        %v140 = vld [vmem:[%s117 + $0x10] sm:$0xff]
        %v141 = vld [vmem:[%s117 + $0x18] sm:$0xff]
        %v142 = vld [vmem:[%s117 + $0x20] sm:$0xff]
        %v143 = vld [vmem:[%s117 + $0x28] sm:$0xff]
        %v144 = vld [vmem:[%s117 + $0x30] sm:$0xff]
        %v145 = vld [vmem:[%s117 + $0x38] sm:$0xff]
        %154 = vrot.lane.b32.xlu0 %v138, 1
        %v155 = vpop.permute.xlu0 %154
        %156 = vrot.lane.b32.xlu0 %v139, 1
        %v157 = vpop.permute.xlu0 %156
        %158 = vrot.lane.b32.xlu0 %v140, 1
        %v159 = vpop.permute.xlu0 %158
        %160 = vrot.lane.b32.xlu0 %v141, 1
        %v161 = vpop.permute.xlu0 %160
        %162 = vrot.lane.b32.xlu0 %v142, 1
        %v163 = vpop.permute.xlu0 %162
        %164 = vrot.lane.b32.xlu0 %v143, 1
        %v165 = vpop.permute.xlu0 %164
        %166 = vrot.lane.b32.xlu0 %v144, 1
        %v167 = vpop.permute.xlu0 %166
        %168 = vrot.lane.b32.xlu0 %v145, 1
        %v169 = vpop.permute.xlu0 %168
        %vm178 = vcmask 7168
        %v179 = vsel %vm178, %v138, %v155
        %v180 = vsel %vm178, %v139, %v157
        %v181 = vsel %vm178, %v140, %v159
        %v182 = vsel %vm178, %v141, %v161
        %v183 = vsel %vm178, %v142, %v163
        %v184 = vsel %vm178, %v143, %v165
        %v185 = vsel %vm178, %v144, %v167
        %v186 = vsel %vm178, %v145, %v169
        %v187 = vmax.f32 %v179, %v138
        %v188 = vmax.f32 %v180, %v139
        %v189 = vmax.f32 %v181, %v140
        %v190 = vmax.f32 %v182, %v141
        %v191 = vmax.f32 %v183, %v142
        %v192 = vmax.f32 %v184, %v143
        %v193 = vmax.f32 %v185, %v144
        %v194 = vmax.f32 %v186, %v145
        %195 = vrot.lane.b32.xlu0 %v138, 127
        %v196 = vpop.permute.xlu0 %195
        %197 = vrot.lane.b32.xlu0 %v139, 127
        %v198 = vpop.permute.xlu0 %197
        %199 = vrot.lane.b32.xlu0 %v140, 127
        %v200 = vpop.permute.xlu0 %199
        %201 = vrot.lane.b32.xlu0 %v141, 127
        %v202 = vpop.permute.xlu0 %201
        %203 = vrot.lane.b32.xlu0 %v142, 127
        %v204 = vpop.permute.xlu0 %203
        %205 = vrot.lane.b32.xlu0 %v143, 127
        %v206 = vpop.permute.xlu0 %205
        %207 = vrot.lane.b32.xlu0 %v144, 127
        %v208 = vpop.permute.xlu0 %207
        %209 = vrot.lane.b32.xlu0 %v145, 127
        %v210 = vpop.permute.xlu0 %209
        %vm219 = vcmask 121856
        %v220 = vsel %vm219, %v196, %v138
        %v221 = vsel %vm219, %v198, %v139
        %v222 = vsel %vm219, %v200, %v140
        %v223 = vsel %vm219, %v202, %v141
        %v224 = vsel %vm219, %v204, %v142
        %v225 = vsel %vm219, %v206, %v143
        %v226 = vsel %vm219, %v208, %v144
        %v227 = vsel %vm219, %v210, %v145
        %v228 = vmax.f32 %v187, %v220
        %v229 = vmax.f32 %v188, %v221
        %v230 = vmax.f32 %v189, %v222
        %v231 = vmax.f32 %v190, %v223
        %v232 = vmax.f32 %v191, %v224
        %v233 = vmax.f32 %v192, %v225
        %v234 = vmax.f32 %v193, %v226
        %v235 = vmax.f32 %v194, %v227
        %vm244 = vcmask 1040384
        %v245 = vrot.slane %v228, 7
        %v246 = vrot.slane %v229, 7
        %v247 = vsel %vm244, %v245, %v246
        %v248 = vrot.slane %v230, 7
        %v249 = vrot.slane %v231, 7
        %v250 = vsel %vm244, %v248, %v249
        %v251 = vrot.slane %v232, 7
        %v252 = vrot.slane %v233, 7
        %v253 = vsel %vm244, %v251, %v252
        %v254 = vrot.slane %v234, 7
        %v255 = vrot.slane %v235, 7
        %v256 = vsel %vm244, %v254, %v255
        %v265 = vsel %vm244, %v228, %v245
        %v266 = vsel %vm244, %v230, %v248
        %v267 = vsel %vm244, %v232, %v251
        %v268 = vsel %vm244, %v234, %v254
        %v269 = vmax.f32 %v265, %v228
        %v270 = vmax.f32 %v247, %v229
        %v271 = vmax.f32 %v266, %v230
        %v272 = vmax.f32 %v250, %v231
        %v273 = vmax.f32 %v267, %v232
        %v274 = vmax.f32 %v253, %v233
        %v275 = vmax.f32 %v268, %v234
        %v276 = vmax.f32 %v256, %v235
        %vm277 = vcmask 1046528
        %v278 = vrot.slane %v228, 1
        %v279 = vrot.slane %v229, 1
        %v280 = vsel %vm277, %v278, %v279
        %v281 = vrot.slane %v230, 1
        %v282 = vrot.slane %v231, 1
        %v283 = vsel %vm277, %v281, %v282
        %v284 = vrot.slane %v232, 1
        %v285 = vrot.slane %v233, 1
        %v286 = vsel %vm277, %v284, %v285
        %v287 = vrot.slane %v234, 1
        %v288 = vrot.slane %v235, 1
        %v289 = vsel %vm277, %v287, %v288
        %v298 = vsel %vm277, %v279, %v229
        %v299 = vsel %vm277, %v282, %v231
        %v300 = vsel %vm277, %v285, %v233
        %v301 = vsel %vm277, %v288, %v235
        %v302 = vmax.f32 %v269, %v280
        %v303 = vmax.f32 %v270, %v298
        %v304 = vmax.f32 %v271, %v283
        %v305 = vmax.f32 %v272, %v299
        %v306 = vmax.f32 %v273, %v286
        %v307 = vmax.f32 %v274, %v300
        %v308 = vmax.f32 %v275, %v289
        %v309 = vmax.f32 %v276, %v301
        %vm310 = vcmp.lt.f32.partialorder %v138, %v302
        %vm311 = vcmp.lt.f32.partialorder %v139, %v303
        %vm312 = vcmp.lt.f32.partialorder %v140, %v304
        %vm313 = vcmp.lt.f32.partialorder %v141, %v305
        %vm314 = vcmp.lt.f32.partialorder %v142, %v306
        %vm315 = vcmp.lt.f32.partialorder %v143, %v307
        %vm316 = vcmp.lt.f32.partialorder %v144, %v308
        %vm317 = vcmp.lt.f32.partialorder %v145, %v309
        %v318 = vsub.f32 %v138, 1.0
        %v319 = vsub.f32 %v139, 1.0
        %v320 = vsub.f32 %v140, 1.0
        %v321 = vsub.f32 %v141, 1.0
        %v322 = vsub.f32 %v142, 1.0
        %v323 = vsub.f32 %v143, 1.0
        %v324 = vsub.f32 %v144, 1.0
        %v325 = vsub.f32 %v145, 1.0
        %v326 = vsel %vm310, %v318, %v138
        %v327 = vsel %vm311, %v319, %v139
        %v328 = vsel %vm312, %v320, %v140
        %v329 = vsel %vm313, %v321, %v141
        %v330 = vsel %vm314, %v322, %v142
        %v331 = vsel %vm315, %v323, %v143
        %v332 = vsel %vm316, %v324, %v144
        %v333 = vsel %vm317, %v325, %v145
        %vm334 = vcmask 130048
        %335 = vst.msk [vmem:[%s135] sm:$0xff] %vm334, %v326
        %336 = vst.msk [vmem:[%s135 + $0x8] sm:$0xff] %vm334, %v327
        %337 = vst.msk [vmem:[%s135 + $0x10] sm:$0xff] %vm334, %v328
        %338 = vst.msk [vmem:[%s135 + $0x18] sm:$0xff] %vm334, %v329
        %339 = vst.msk [vmem:[%s135 + $0x20] sm:$0xff] %vm334, %v330
        %340 = vst.msk [vmem:[%s135 + $0x28] sm:$0xff] %vm334, %v331
        %341 = vst.msk [vmem:[%s135 + $0x30] sm:$0xff] %vm334, %v332
        %342 = vst.msk [vmem:[%s135 + $0x38] sm:$0xff] %vm334, %v333
        %s343 = sand.u32 %s52, 1
        %s344 = scalar_lea.sflag [#allocation4], %s343
        %s345 = sand.u32 %s52, 1
        %s346 = smul.addr %s345, 64
        %s347 = scalar_lea.vmem [#allocation5], %s346
        // Predicated region
        $region29: #{tpu_custom_call.1} parent=23 // pred_check
          %p348 = pneg %p62
        $region30: #{tpu_custom_call.1} parent=23 // pred_check_branch
          %350 = sbr.rel (%p348) target = $region32
        $region31: #{tpu_custom_call.1} parent=23 // pred_region
          %s351 = smul.u32 4, %s18
          %s353 = ssub.s32 1024, 1024
          %354 = vsyncadd %s344, %s353
          %s355 = smul.addr %s351, 2
          %s356 = smul.addr %s355, 128
          %s357 = scalar_lea.hbm %s1, %s356
          %s358 = sshll.u32 %s347, 4
          %s359 = int_to_ptr.vmem [resolvable:$true] %s358
          %364 = dma.vmem_to_hbm [thread:$0]  %s359, 1024, %s357, %s344, 128, 128, 8
        $region32: #{tpu_custom_call.1} parent=23 // pred_fallthru
          _
      $region24: #{tpu_custom_call.1} parent=5 // pred_fallthru
        _
      %p365 = scmp.le.s32.totalorder 2, %s13
      // Predicated region
      $region33: #{tpu_custom_call.1} parent=5 // pred_check
        %p366 = pneg %p365
      $region34: #{tpu_custom_call.1} parent=5 // pred_check_branch
        %368 = sbr.rel (%p366) target = $region36
      $region35: #{tpu_custom_call.1} parent=5 // pred_region
        %s369 = ssub.s32 %s13, 2
        // Predicated region
        $region37: #{tpu_custom_call.1} parent=35 // pred_check
          %p370 = pneg %p68
        $region38: #{tpu_custom_call.1} parent=35 // pred_check_branch
          %372 = sbr.rel (%p370) target = $region40
        $region39: #{tpu_custom_call.1} parent=35 // pred_region
          %s373 = sand.u32 %s53, 1
          %s374 = scalar_lea.sflag [#allocation4], %s373
          %s375 = sand.u32 %s53, 1
          %s376 = smul.addr %s375, 64
          %s377 = scalar_lea.vmem [#allocation5], %s376
          %378 = dma.done %s374, 1024
        $region40: #{tpu_custom_call.1} parent=35 // pred_fallthru
          _
      $region36: #{tpu_custom_call.1} parent=5 // pred_fallthru
        _
    $region6: #{tpu_custom_call.1} parent=1 // loop_footer
      %s17 = sadd.s32 1, %s13
    $region7: #{tpu_custom_call.1} parent=1 // loop_footer_branch
      %12 = sbr.rel target = $region3
    $region8: #{tpu_custom_call.1} parent=1 // loop_exit
      _
    %379 = vsyncpa [#allocation3], 1
    %s380 = scalar_lea.sflag [#allocation3], 1
    %381 = vsyncpa %s380, 1
    %382 = vsyncpa [#allocation4], 1
    %s383 = scalar_lea.sflag [#allocation4], 1
    %384 = vsyncpa %s383, 1

</llo_original>
